<compile_context>
chip_gen: v7x
topology: tpu7x:2x2x1
jax: 0.10.0
libtpu: 0.0.40
codegen_flags: <defaults>
</compile_context>

<pallas_src>
import math

import jax
import jax.numpy as jnp
from jax import lax
from jax.experimental import pallas as pl
from jax.experimental.pallas import tpu as pltpu


def _round_up(x: int, m: int) -> int:
    return ((x + m - 1) // m) * m


def _cdiv(a: int, b: int) -> int:
    return -(-a // b)


def _build_energy_kernel(tile_n: int, tile_d: int, d: int, num_k: int):
    """Build the kernel body for a given (static) tiling."""
    chunks_per_block = tile_d // 128
    rem = d - (num_k - 1) * tile_d            # valid columns in the last k block
    last_full = rem // 128
    last_tail = rem % 128
    last_ragged = rem != tile_d

    # Bound fully-unrolled code (~5k instrs); wider blocks loop via fori_loop.
    static_limit = max(8, 1024 // max(tile_n // 8, 1))
    group = max(1, min(chunks_per_block, 2048 // max(tile_n, 1), 16))

    def kernel(bias_ref, x_ref, o_ref, acc_ref):
        # bias_ref: SMEM (1,)              f32  (scalar-prefetched explicit_bias)
        # x_ref:    VMEM (tile_n, tile_d)  input dtype (never materialized as f32)
        # o_ref:    VMEM (tile_n, 1)       f32  (per-row energy)
        # acc_ref:  VMEM (tile_n, 128)     f32  (lane-shaped partial sums)
        k = pl.program_id(1)

        @pl.when(k == 0)
        def _init():
            acc_ref[...] = jnp.zeros_like(acc_ref)

        def accum_chunk(start, width):
            # One 128-lane column chunk: ref-sliced load (no full-tile f32
            # temporary), in-register upcast + square, accumulate into acc_ref.
            if not isinstance(start, int):
                start = pl.multiple_of(start, 128)
            xj = x_ref[:, pl.ds(start, 128)].astype(jnp.float32)
            sq = xj * xj
            if width < 128:
                # Ragged tail chunk: mask columns beyond the true feature dim.
                # Select (not multiply) so garbage NaN/Inf never propagates.
                col = lax.broadcasted_iota(jnp.int32, sq.shape, 1)
                sq = jnp.where(col < width, sq, jnp.zeros_like(sq))
            acc_ref[...] += sq

        def accumulate(n_full, tail_cols):
            if n_full <= static_limit:
                for j in range(n_full):
                    accum_chunk(j * 128, 128)
            else:
                n_groups = n_full // group

                def body(g, carry):
                    base = g * (group * 128)
                    for jj in range(group):
                        accum_chunk(base + jj * 128, 128)
                    return carry

                lax.fori_loop(0, n_groups, body, 0)
                for j in range(n_groups * group, n_full):
                    accum_chunk(j * 128, 128)
            if tail_cols > 0:
                accum_chunk(n_full * 128, tail_cols)

        if not last_ragged:
            accumulate(chunks_per_block, 0)
        elif num_k == 1:
            accumulate(last_full, last_tail)
        else:
            @pl.when(k < num_k - 1)
            def _full_block():
                accumulate(chunks_per_block, 0)

            @pl.when(k == num_k - 1)
            def _ragged_block():
                accumulate(last_full, last_tail)

        @pl.when(k == num_k - 1)
        def _finalize():
            # One cross-lane (XLU) reduce per output tile; bias added exactly once.
            energy = 0.5 * jnp.sum(acc_ref[...], axis=-1, keepdims=True)
            energy = energy + bias_ref[0]
            o_ref[...] = energy.astype(o_ref.dtype)

    return kernel


def energy_forward(x, explicit_bias, add_explicit_bias=True,
                   target_tile_bytes=12 << 20):
    """Pallas TPU implementation of Energy.forward (truncator / censoring = None).

    Returns 0.5 * sum_features(x**2) (+ explicit_bias) with shape (N, 1), f32.
    """
    n = x.shape[0]
    d = int(math.prod(x.shape[1:]))
    x2d = x.reshape(n, d)                    # metadata-only reshape; native dtype
    itemsize = x2d.dtype.itemsize
    sublane = max(8, 32 // itemsize)
    d128 = _round_up(d, 128)

    # ---- Row tiling: aim for the byte target; prefer >= 2 row tiles when N
    # allows so the "parallel" axis feeds both v7x TensorCores.
    tile_n = target_tile_bytes // max(d128 * itemsize, 1)
    tile_n = max(256, min(2048, _round_up(max(tile_n, 1), sublane)))
    if n <= tile_n:
        tile_n = _round_up(max(_cdiv(n, 2), 1), sublane)
    num_i = _cdiv(n, tile_n)
    n_pad = num_i * tile_n

    # ---- Column tiling: ~target_tile_bytes per input buffer (amortizes the
    # ~0.35us per-grid-step overhead), multiple of 128.  The feature dim is
    # never padded in HBM -- ragged last blocks are masked in-kernel.
    tile_d = (target_tile_bytes // max(tile_n * itemsize, 1)) // 128 * 128
    tile_d = max(128, min(tile_d, d128))
    num_k = _cdiv(d, tile_d)

    bias = explicit_bias.reshape(-1).astype(jnp.float32)
    if not add_explicit_bias:
        bias = jnp.zeros_like(bias)

    kernel = _build_energy_kernel(tile_n, tile_d, d, num_k)

    # Explicit VMEM budget: input double-buffer + accumulator + tiny output,
    # plus headroom.  Clamped to 48 MiB: safe on v7x (64 MiB physical) and
    # raises the 16 / 32 MiB default scoped limits on v5e / v6e.
    tile_bytes = tile_n * tile_d * itemsize
    vmem_limit = 2 * tile_bytes + tile_n * 128 * 4 + 2 * tile_n * 4 + (4 << 20)
    vmem_limit = int(min(max(vmem_limit, 32 << 20), 48 << 20))

    out = pl.pallas_call(
        kernel,
        out_shape=jax.ShapeDtypeStruct((n_pad, 1), jnp.float32),
        grid_spec=pltpu.PrefetchScalarGridSpec(
            num_scalar_prefetch=1,                       # explicit_bias -> SMEM
            grid=(num_i, num_k),                         # reduction axis LAST
            in_specs=[pl.BlockSpec((tile_n, tile_d), lambda i, k, b: (i, k))],
            out_specs=pl.BlockSpec((tile_n, 1), lambda i, k, b: (i, 0)),
            scratch_shapes=[pltpu.VMEM((tile_n, 128), jnp.float32)],
        ),
        compiler_params=pltpu.CompilerParams(
            dimension_semantics=("parallel", "arbitrary"),
            vmem_limit_bytes=vmem_limit,
        ),
        cost_estimate=pl.CostEstimate(
            flops=2 * n * d,
            transcendentals=0,
            bytes_accessed=n * d * itemsize + n * 4 + 4,
        ),
    )(bias, x2d)

    return out[:n]


if __name__ == "__main__":
    key = jax.random.PRNGKey(0)
    k1, k2, k3 = jax.random.split(key, 3)

    # nn.Parameter(torch.ones(1) * 10)
    explicit_bias = jnp.ones((1,), dtype=jnp.float32) * 10.0

    def ref_energy(xv):
        flat = xv.reshape(xv.shape[0], -1).astype(jnp.float32)
        return 0.5 * jnp.sum(flat ** 2, axis=-1, keepdims=True) + explicit_bias

    # 1) Small NCHW image batch (single k step, static chunk loop).
    x = jax.random.normal(k1, (2, 4, 16, 16), dtype=jnp.float32)
    got = jax.block_until_ready(energy_forward(x, explicit_bias))
    assert got.shape == (2, 1)
    assert jnp.allclose(got, ref_energy(x), rtol=1e-5, atol=1e-4)

    # 2) Force a multi-step K reduction (4 k-tiles of 256 columns) to exercise
    #    the accumulator init / bias-once finalize across the grid.
    got = jax.block_until_ready(
        energy_forward(x, explicit_bias, target_tile_bytes=8 * 1024))
    assert jnp.allclose(got, ref_energy(x), rtol=1e-5, atol=1e-4)

    # 3) Ragged feature dim (300 cols -> masked 44-wide tail chunk) and ragged
    #    rows (5 rows in an 8-row tile); no HBM padding copy anywhere.
    x_rag = jax.random.normal(k2, (5, 300), dtype=jnp.float32)
    got = jax.block_until_ready(energy_forward(x_rag, explicit_bias))
    assert got.shape == (5, 1)
    assert jnp.allclose(got, ref_energy(x_rag), rtol=1e-5, atol=1e-4)

    # 4) Larger batch: two 256-row tiles on the "parallel" axis (v7x megacore).
    x_big = jax.random.normal(k3, (512, 2048), dtype=jnp.float32)
    got = jax.block_until_ready(energy_forward(x_big, explicit_bias))
    assert got.shape == (512, 1)
    assert jnp.allclose(got, ref_energy(x_big), rtol=1e-5, atol=1e-2)

    # 5) No-explicit-bias path matches vanilla_energy alone.
    got = jax.block_until_ready(
        energy_forward(x, explicit_bias, add_explicit_bias=False))
    assert jnp.allclose(got, ref_energy(x) - explicit_bias, rtol=1e-5, atol=1e-4)

    print("KERNEL_OK")
</pallas_src>

<mosaic_0001>
module attributes {stable_mosaic.version = 11 : i64} {
  func.func @kernel(%arg0: i32, %arg1: i32, %arg2: memref<1xf32, #tpu.memory_space<smem>>, %arg3: memref<8x1024xf32, #tpu.memory_space<vmem>>, %arg4: memref<8x1xf32, #tpu.memory_space<vmem>>, %arg5: memref<8x128xf32, #tpu.memory_space<vmem>>) attributes {dimension_semantics = [#tpu.dimension_semantics<parallel>, #tpu.dimension_semantics<arbitrary>], iteration_bounds = array<i64: 1, 1>, scalar_prefetch = 1 : i64, scratch_operands = 1 : i64, tpu.core_type = #tpu.core_type<tc>, window_params = [{transform_indices = @transform_0, window_bounds = array<i64: 8, 1024>}, {transform_indices = @transform_1, window_bounds = array<i64: 8, 1>}]} {
    %c0_i32 = arith.constant 0 : i32
    %0 = arith.cmpi eq, %arg1, %c0_i32 : i32
    %1 = arith.extui %0 : i1 to i32
    %c0_i32_0 = arith.constant 0 : i32
    %2 = arith.cmpi ne, %1, %c0_i32_0 : i32
    scf.if %2 {
      %cst = arith.constant 0.000000e+00 : f32
      %46 = vector.broadcast %cst : f32 to vector<8x128xf32>
      %c0_43 = arith.constant 0 : index
      %c0_44 = arith.constant 0 : index
      %47 = vector.load %arg5[%c0_43, %c0_44] : memref<8x128xf32, #tpu.memory_space<vmem>>, vector<8x128xf32>
      tpu.vector_store %arg5[%c0_43, %c0_44], %46 {strides = array<i32>} : memref<8x128xf32, #tpu.memory_space<vmem>>, vector<8x128xf32>,
    } else {
    }
    %c0 = arith.constant 0 : index
    %c0_1 = arith.constant 0 : index
    %3 = vector.load %arg3[%c0, %c0_1] : memref<8x1024xf32, #tpu.memory_space<vmem>>, vector<8x128xf32>
    %4 = arith.mulf %3, %3 : vector<8x128xf32>
    %c0_2 = arith.constant 0 : index
    %c0_3 = arith.constant 0 : index
    %5 = vector.load %arg5[%c0_2, %c0_3] : memref<8x128xf32, #tpu.memory_space<vmem>>, vector<8x128xf32>
    %6 = arith.addf %5, %4 : vector<8x128xf32>
    %c0_4 = arith.constant 0 : index
    %c0_5 = arith.constant 0 : index
    %7 = vector.load %arg5[%c0_4, %c0_5] : memref<8x128xf32, #tpu.memory_space<vmem>>, vector<8x128xf32>
    tpu.vector_store %arg5[%c0_4, %c0_5], %6 {strides = array<i32>} : memref<8x128xf32, #tpu.memory_space<vmem>>, vector<8x128xf32>,
    %c0_6 = arith.constant 0 : index
    %c128 = arith.constant 128 : index
    %8 = vector.load %arg3[%c0_6, %c128] : memref<8x1024xf32, #tpu.memory_space<vmem>>, vector<8x128xf32>
    %9 = arith.mulf %8, %8 : vector<8x128xf32>
    %c0_7 = arith.constant 0 : index
    %c0_8 = arith.constant 0 : index
    %10 = vector.load %arg5[%c0_7, %c0_8] : memref<8x128xf32, #tpu.memory_space<vmem>>, vector<8x128xf32>
    %11 = arith.addf %10, %9 : vector<8x128xf32>
    %c0_9 = arith.constant 0 : index
    %c0_10 = arith.constant 0 : index
    %12 = vector.load %arg5[%c0_9, %c0_10] : memref<8x128xf32, #tpu.memory_space<vmem>>, vector<8x128xf32>
    tpu.vector_store %arg5[%c0_9, %c0_10], %11 {strides = array<i32>} : memref<8x128xf32, #tpu.memory_space<vmem>>, vector<8x128xf32>,
    %c0_11 = arith.constant 0 : index
    %c256 = arith.constant 256 : index
    %13 = vector.load %arg3[%c0_11, %c256] : memref<8x1024xf32, #tpu.memory_space<vmem>>, vector<8x128xf32>
    %14 = arith.mulf %13, %13 : vector<8x128xf32>
    %c0_12 = arith.constant 0 : index
    %c0_13 = arith.constant 0 : index
    %15 = vector.load %arg5[%c0_12, %c0_13] : memref<8x128xf32, #tpu.memory_space<vmem>>, vector<8x128xf32>
    %16 = arith.addf %15, %14 : vector<8x128xf32>
    %c0_14 = arith.constant 0 : index
    %c0_15 = arith.constant 0 : index
    %17 = vector.load %arg5[%c0_14, %c0_15] : memref<8x128xf32, #tpu.memory_space<vmem>>, vector<8x128xf32>
    tpu.vector_store %arg5[%c0_14, %c0_15], %16 {strides = array<i32>} : memref<8x128xf32, #tpu.memory_space<vmem>>, vector<8x128xf32>,
    %c0_16 = arith.constant 0 : index
    %c384 = arith.constant 384 : index
    %18 = vector.load %arg3[%c0_16, %c384] : memref<8x1024xf32, #tpu.memory_space<vmem>>, vector<8x128xf32>
    %19 = arith.mulf %18, %18 : vector<8x128xf32>
    %c0_17 = arith.constant 0 : index
    %c0_18 = arith.constant 0 : index
    %20 = vector.load %arg5[%c0_17, %c0_18] : memref<8x128xf32, #tpu.memory_space<vmem>>, vector<8x128xf32>
    %21 = arith.addf %20, %19 : vector<8x128xf32>
    %c0_19 = arith.constant 0 : index
    %c0_20 = arith.constant 0 : index
    %22 = vector.load %arg5[%c0_19, %c0_20] : memref<8x128xf32, #tpu.memory_space<vmem>>, vector<8x128xf32>
    tpu.vector_store %arg5[%c0_19, %c0_20], %21 {strides = array<i32>} : memref<8x128xf32, #tpu.memory_space<vmem>>, vector<8x128xf32>,
    %c0_21 = arith.constant 0 : index
    %c512 = arith.constant 512 : index
    %23 = vector.load %arg3[%c0_21, %c512] : memref<8x1024xf32, #tpu.memory_space<vmem>>, vector<8x128xf32>
    %24 = arith.mulf %23, %23 : vector<8x128xf32>
    %c0_22 = arith.constant 0 : index
    %c0_23 = arith.constant 0 : index
    %25 = vector.load %arg5[%c0_22, %c0_23] : memref<8x128xf32, #tpu.memory_space<vmem>>, vector<8x128xf32>
    %26 = arith.addf %25, %24 : vector<8x128xf32>
    %c0_24 = arith.constant 0 : index
    %c0_25 = arith.constant 0 : index
    %27 = vector.load %arg5[%c0_24, %c0_25] : memref<8x128xf32, #tpu.memory_space<vmem>>, vector<8x128xf32>
    tpu.vector_store %arg5[%c0_24, %c0_25], %26 {strides = array<i32>} : memref<8x128xf32, #tpu.memory_space<vmem>>, vector<8x128xf32>,
    %c0_26 = arith.constant 0 : index
    %c640 = arith.constant 640 : index
    %28 = vector.load %arg3[%c0_26, %c640] : memref<8x1024xf32, #tpu.memory_space<vmem>>, vector<8x128xf32>
    %29 = arith.mulf %28, %28 : vector<8x128xf32>
    %c0_27 = arith.constant 0 : index
    %c0_28 = arith.constant 0 : index
    %30 = vector.load %arg5[%c0_27, %c0_28] : memref<8x128xf32, #tpu.memory_space<vmem>>, vector<8x128xf32>
    %31 = arith.addf %30, %29 : vector<8x128xf32>
    %c0_29 = arith.constant 0 : index
    %c0_30 = arith.constant 0 : index
    %32 = vector.load %arg5[%c0_29, %c0_30] : memref<8x128xf32, #tpu.memory_space<vmem>>, vector<8x128xf32>
    tpu.vector_store %arg5[%c0_29, %c0_30], %31 {strides = array<i32>} : memref<8x128xf32, #tpu.memory_space<vmem>>, vector<8x128xf32>,
    %c0_31 = arith.constant 0 : index
    %c768 = arith.constant 768 : index
    %33 = vector.load %arg3[%c0_31, %c768] : memref<8x1024xf32, #tpu.memory_space<vmem>>, vector<8x128xf32>
    %34 = arith.mulf %33, %33 : vector<8x128xf32>
    %c0_32 = arith.constant 0 : index
    %c0_33 = arith.constant 0 : index
    %35 = vector.load %arg5[%c0_32, %c0_33] : memref<8x128xf32, #tpu.memory_space<vmem>>, vector<8x128xf32>
    %36 = arith.addf %35, %34 : vector<8x128xf32>
    %c0_34 = arith.constant 0 : index
    %c0_35 = arith.constant 0 : index
    %37 = vector.load %arg5[%c0_34, %c0_35] : memref<8x128xf32, #tpu.memory_space<vmem>>, vector<8x128xf32>
    tpu.vector_store %arg5[%c0_34, %c0_35], %36 {strides = array<i32>} : memref<8x128xf32, #tpu.memory_space<vmem>>, vector<8x128xf32>,
    %c0_36 = arith.constant 0 : index
    %c896 = arith.constant 896 : index
    %38 = vector.load %arg3[%c0_36, %c896] : memref<8x1024xf32, #tpu.memory_space<vmem>>, vector<8x128xf32>
    %39 = arith.mulf %38, %38 : vector<8x128xf32>
    %c0_37 = arith.constant 0 : index
    %c0_38 = arith.constant 0 : index
    %40 = vector.load %arg5[%c0_37, %c0_38] : memref<8x128xf32, #tpu.memory_space<vmem>>, vector<8x128xf32>
    %41 = arith.addf %40, %39 : vector<8x128xf32>
    %c0_39 = arith.constant 0 : index
    %c0_40 = arith.constant 0 : index
    %42 = vector.load %arg5[%c0_39, %c0_40] : memref<8x128xf32, #tpu.memory_space<vmem>>, vector<8x128xf32>
    tpu.vector_store %arg5[%c0_39, %c0_40], %41 {strides = array<i32>} : memref<8x128xf32, #tpu.memory_space<vmem>>, vector<8x128xf32>,
    %c0_i32_41 = arith.constant 0 : i32
    %43 = arith.cmpi eq, %arg1, %c0_i32_41 : i32
    %44 = arith.extui %43 : i1 to i32
    %c0_i32_42 = arith.constant 0 : i32
    %45 = arith.cmpi ne, %44, %c0_i32_42 : i32
    scf.if %45 {
      %c0_43 = arith.constant 0 : index
      %c0_44 = arith.constant 0 : index
      %46 = vector.load %arg5[%c0_43, %c0_44] : memref<8x128xf32, #tpu.memory_space<vmem>>, vector<8x128xf32>
      %cst = arith.constant dense<0.000000e+00> : vector<8xf32>
      %47 = vector.multi_reduction <add>, %46, %cst [1] : vector<8x128xf32> to vector<8xf32>
      %48 = vector.shape_cast %47 : vector<8xf32> to vector<8x1xf32>
      %cst_45 = arith.constant 5.000000e-01 : f32
      %49 = vector.broadcast %cst_45 : f32 to vector<8x1xf32>
      %50 = arith.mulf %49, %48 : vector<8x1xf32>
      %c0_46 = arith.constant 0 : index
      %51 = memref.load %arg2[%c0_46] : memref<1xf32, #tpu.memory_space<smem>>
      %52 = vector.broadcast %51 : f32 to vector<8x1xf32>
      %53 = arith.addf %50, %52 : vector<8x1xf32>
      %c0_47 = arith.constant 0 : index
      %c0_48 = arith.constant 0 : index
      %54 = vector.load %arg4[%c0_47, %c0_48] : memref<8x1xf32, #tpu.memory_space<vmem>>, vector<8x1xf32>
      tpu.vector_store %arg4[%c0_47, %c0_48], %53 {strides = array<i32>} : memref<8x1xf32, #tpu.memory_space<vmem>>, vector<8x1xf32>,
    } else {
    }
    return
  }
  func.func @transform_0(%arg0: i32, %arg1: i32, %arg2: memref<1xf32, #tpu.memory_space<smem>>) -> (i32, i32) {
    %c0_i32 = arith.constant 0 : i32
    return %arg0, %arg1 : i32, i32
  }
  func.func @transform_1(%arg0: i32, %arg1: i32, %arg2: memref<1xf32, #tpu.memory_space<smem>>) -> (i32, i32) {
    %c0_i32 = arith.constant 0 : i32
    %c0_i32_0 = arith.constant 0 : i32
    return %arg0, %c0_i32 : i32, i32
  }
}

</mosaic_0001>

<llo_original>
// kernel: tpu_custom_call.1
$region0: #{tpu_custom_call.1}
  #allocation0 [shape = 'u32[]', space=smem, size = 0x4, offset = 0x4, fixed_abs, tag = 'smem constant byte address 0x4 - core index']
  #allocation1 [shape = 'u32[144,128]{1,0:T(1,128)}', space=vmem, size = 0x12000, scoped, tag = 'internal scratch']
  #allocation2 [shape = 'f32[8,128]{1,0:T(8,128)}', space=vmem, size = 0x1000, scoped, tag = 'scratch operand']
  #allocation3 [shape = 's32[1]{0}', space=sflag, size = 0x4, scoped, tag = 'scoped memory for tpu_custom_call.1']
  #allocation4 [shape = 'f32[1]{0:T(128)S(6)}', space=smem, size = 0x200, scoped, tag = 'prefetched SMEM operand 0']
  %s0 = inlined_call_operand.<no memory space> [shape: f32[1], index: 0, kind: input, shape index: {}]
  %s1 = inlined_call_operand.hbm [shape: f32[2,1024], index: 1, kind: input, shape index: {}]
  %s2 = inlined_call_operand.vmem [shape: f32[8,1], index: 2, kind: output, shape index: {}]
  %s3 = sld [smem:[#allocation0]]
  $region26: #{tpu_custom_call.1} parent=0
    _
  %s5 = ssub.s32 1, %s3
  %s6 = scalar_select 0, %s5, %s3
  %7 = sst [smem:[#allocation4]] %s0
  $region1: #{tpu_custom_call.1} parent=0
    #allocation5 [shape = 'u8[32768]{0}', space=vmem, size = 0x8000, scoped, tag = 'input window, operand 1, single buffered']
    #allocation6 [shape = 's32[1]{0}', space=sflag, size = 0x4, scoped, tag = 'scoped memory for tpu_custom_call.1']
    %8 = vsyncpa [#allocation6], 0
    // Predicated region
    $region2: #{tpu_custom_call.1} parent=1 // pred_check
      _
    $region3: #{tpu_custom_call.1} parent=1 // pred_check_branch
      %10 = sbr.rel (0) target = $region5
    $region4: #{tpu_custom_call.1} parent=1 // pred_region
      %s12 = ssub.s32 1024, 256
      %13 = vsyncadd [#allocation6], %s12
      %s14 = sshll.u32 [#allocation5], 4
      %s15 = int_to_ptr.vmem [resolvable:$true] %s14
      %20 = dma.hbm_to_vmem [thread:$0]  %s1, 256, %s15, [#allocation6], 256, 256, 16
    $region5: #{tpu_custom_call.1} parent=1 // pred_fallthru
      _
    // Predicated region
    $region6: #{tpu_custom_call.1} parent=1 // pred_check
      _
    $region7: #{tpu_custom_call.1} parent=1 // pred_check_branch
      %22 = sbr.rel (0) target = $region9
    $region8: #{tpu_custom_call.1} parent=1 // pred_region
      %23 = dma.done [#allocation6], 1024
    $region9: #{tpu_custom_call.1} parent=1 // pred_fallthru
      _
    %p24 = scmp.eq.s32.totalorder 0, 0
    // Predicated region
    $region10: #{tpu_custom_call.1} parent=1 // pred_check
      %p25 = pneg %p24
    $region11: #{tpu_custom_call.1} parent=1 // pred_check_branch
      %27 = sbr.rel (%p25) target = $region13
    $region12: #{tpu_custom_call.1} parent=1 // pred_region
      %28 = vst [vmem:[#allocation2] sm:$0xff] 0.0
    $region13: #{tpu_custom_call.1} parent=1 // pred_fallthru
      _
    %v29 = vld [vmem:[#allocation5] sm:$0x3]
    %v30 = vld [vmem:[#allocation5 + $0x10] sm:$0x3]
    %v31 = vld [vmem:[#allocation5 + $0x20] sm:$0x3]
    %v32 = vld [vmem:[#allocation5 + $0x30] sm:$0x3]
    %v33 = vmul.f32 %v29, %v29
    %v34 = vmul.f32 %v30, %v30
    %v35 = vmul.f32 %v31, %v31
    %v36 = vmul.f32 %v32, %v32
    %v37 = vld [vmem:[#allocation2] sm:$0xff]
    %v42 = vcombine.low %v33, %v34
    %v43 = vcombine.low %v35, %v36
    %v45 = vunpack.c.l.s4 1983009808
    %v46 = vunpack.c.0.s8 %v45
    %v47 = vlaneseq
    %v48 = vshrl.u32 %v47, 7
    %v49 = vsub.s32 %v46, %v48
    %v50 = vrot.slane %v42, %v49
    %v52 = vunpack.c.l.s4 1983009808
    %v53 = vunpack.c.0.s8 %v52
    %v54 = vlaneseq
    %v55 = vshrl.u32 %v54, 7
    %v56 = vsub.s32 %v53, %v55
    %v57 = vrot.slane %v43, %v56
    %v58 = vcombine.low %v50, %v57
    %v60 = vadd.f32 %v37, %v58
    %61 = vst [vmem:[#allocation2] sm:$0xff] %v60
    %v62 = vld [vmem:[#allocation5 + $0x2] sm:$0x3]
    %v63 = vld [vmem:[#allocation5 + $0x12] sm:$0x3]
    %v64 = vld [vmem:[#allocation5 + $0x22] sm:$0x3]
    %v65 = vld [vmem:[#allocation5 + $0x32] sm:$0x3]
    %v66 = vmul.f32 %v62, %v62
    %v67 = vmul.f32 %v63, %v63
    %v68 = vmul.f32 %v64, %v64
    %v69 = vmul.f32 %v65, %v65
    %v70 = vld [vmem:[#allocation2] sm:$0xff]
    %v75 = vcombine.low %v66, %v67
    %v76 = vcombine.low %v68, %v69
    %v78 = vunpack.c.l.s4 1983009808
    %v79 = vunpack.c.0.s8 %v78
    %v80 = vlaneseq
    %v81 = vshrl.u32 %v80, 7
    %v82 = vsub.s32 %v79, %v81
    %v83 = vrot.slane %v75, %v82
    %v85 = vunpack.c.l.s4 1983009808
    %v86 = vunpack.c.0.s8 %v85
    %v87 = vlaneseq
    %v88 = vshrl.u32 %v87, 7
    %v89 = vsub.s32 %v86, %v88
    %v90 = vrot.slane %v76, %v89
    %v91 = vcombine.low %v83, %v90
    %v93 = vadd.f32 %v70, %v91
    %94 = vst [vmem:[#allocation2] sm:$0xff] %v93
    %v95 = vld [vmem:[#allocation5 + $0x4] sm:$0x3]
    %v96 = vld [vmem:[#allocation5 + $0x14] sm:$0x3]
    %v97 = vld [vmem:[#allocation5 + $0x24] sm:$0x3]
    %v98 = vld [vmem:[#allocation5 + $0x34] sm:$0x3]
    %v99 = vmul.f32 %v95, %v95
    %v100 = vmul.f32 %v96, %v96
    %v101 = vmul.f32 %v97, %v97
    %v102 = vmul.f32 %v98, %v98
    %v103 = vld [vmem:[#allocation2] sm:$0xff]
    %v108 = vcombine.low %v99, %v100
    %v109 = vcombine.low %v101, %v102
    %v111 = vunpack.c.l.s4 1983009808
    %v112 = vunpack.c.0.s8 %v111
    %v113 = vlaneseq
    %v114 = vshrl.u32 %v113, 7
    %v115 = vsub.s32 %v112, %v114
    %v116 = vrot.slane %v108, %v115
    %v118 = vunpack.c.l.s4 1983009808
    %v119 = vunpack.c.0.s8 %v118
    %v120 = vlaneseq
    %v121 = vshrl.u32 %v120, 7
    %v122 = vsub.s32 %v119, %v121
    %v123 = vrot.slane %v109, %v122
    %v124 = vcombine.low %v116, %v123
    %v126 = vadd.f32 %v103, %v124
    %127 = vst [vmem:[#allocation2] sm:$0xff] %v126
    %v128 = vld [vmem:[#allocation5 + $0x6] sm:$0x3]
    %v129 = vld [vmem:[#allocation5 + $0x16] sm:$0x3]
    %v130 = vld [vmem:[#allocation5 + $0x26] sm:$0x3]
    %v131 = vld [vmem:[#allocation5 + $0x36] sm:$0x3]
    %v132 = vmul.f32 %v128, %v128
    %v133 = vmul.f32 %v129, %v129
    %v134 = vmul.f32 %v130, %v130
    %v135 = vmul.f32 %v131, %v131
    %v136 = vld [vmem:[#allocation2] sm:$0xff]
    %v141 = vcombine.low %v132, %v133
    %v142 = vcombine.low %v134, %v135
    %v144 = vunpack.c.l.s4 1983009808
    %v145 = vunpack.c.0.s8 %v144
    %v146 = vlaneseq
    %v147 = vshrl.u32 %v146, 7
    %v148 = vsub.s32 %v145, %v147
    %v149 = vrot.slane %v141, %v148
    %v151 = vunpack.c.l.s4 1983009808
    %v152 = vunpack.c.0.s8 %v151
    %v153 = vlaneseq
    %v154 = vshrl.u32 %v153, 7
    %v155 = vsub.s32 %v152, %v154
    %v156 = vrot.slane %v142, %v155
    %v157 = vcombine.low %v149, %v156
    %v159 = vadd.f32 %v136, %v157
    %160 = vst [vmem:[#allocation2] sm:$0xff] %v159
    %v161 = vld [vmem:[#allocation5 + $0x8] sm:$0x3]
    %v162 = vld [vmem:[#allocation5 + $0x18] sm:$0x3]
    %v163 = vld [vmem:[#allocation5 + $0x28] sm:$0x3]
    %v164 = vld [vmem:[#allocation5 + $0x38] sm:$0x3]
    %v165 = vmul.f32 %v161, %v161
    %v166 = vmul.f32 %v162, %v162
    %v167 = vmul.f32 %v163, %v163
    %v168 = vmul.f32 %v164, %v164
    %v169 = vld [vmem:[#allocation2] sm:$0xff]
    %v174 = vcombine.low %v165, %v166
    %v175 = vcombine.low %v167, %v168
    %v177 = vunpack.c.l.s4 1983009808
    %v178 = vunpack.c.0.s8 %v177
    %v179 = vlaneseq
    %v180 = vshrl.u32 %v179, 7
    %v181 = vsub.s32 %v178, %v180
    %v182 = vrot.slane %v174, %v181
    %v184 = vunpack.c.l.s4 1983009808
    %v185 = vunpack.c.0.s8 %v184
    %v186 = vlaneseq
    %v187 = vshrl.u32 %v186, 7
    %v188 = vsub.s32 %v185, %v187
    %v189 = vrot.slane %v175, %v188
    %v190 = vcombine.low %v182, %v189
    %v192 = vadd.f32 %v169, %v190
    %193 = vst [vmem:[#allocation2] sm:$0xff] %v192
    %v194 = vld [vmem:[#allocation5 + $0xa] sm:$0x3]
    %v195 = vld [vmem:[#allocation5 + $0x1a] sm:$0x3]
    %v196 = vld [vmem:[#allocation5 + $0x2a] sm:$0x3]
    %v197 = vld [vmem:[#allocation5 + $0x3a] sm:$0x3]
    %v198 = vmul.f32 %v194, %v194
    %v199 = vmul.f32 %v195, %v195
    %v200 = vmul.f32 %v196, %v196
    %v201 = vmul.f32 %v197, %v197
    %v202 = vld [vmem:[#allocation2] sm:$0xff]
    %v207 = vcombine.low %v198, %v199
    %v208 = vcombine.low %v200, %v201
    %v210 = vunpack.c.l.s4 1983009808
    %v211 = vunpack.c.0.s8 %v210
    %v212 = vlaneseq
    %v213 = vshrl.u32 %v212, 7
    %v214 = vsub.s32 %v211, %v213
    %v215 = vrot.slane %v207, %v214
    %v217 = vunpack.c.l.s4 1983009808
    %v218 = vunpack.c.0.s8 %v217
    %v219 = vlaneseq
    %v220 = vshrl.u32 %v219, 7
    %v221 = vsub.s32 %v218, %v220
    %v222 = vrot.slane %v208, %v221
    %v223 = vcombine.low %v215, %v222
    %v225 = vadd.f32 %v202, %v223
    %226 = vst [vmem:[#allocation2] sm:$0xff] %v225
    %v227 = vld [vmem:[#allocation5 + $0xc] sm:$0x3]
    %v228 = vld [vmem:[#allocation5 + $0x1c] sm:$0x3]
    %v229 = vld [vmem:[#allocation5 + $0x2c] sm:$0x3]
    %v230 = vld [vmem:[#allocation5 + $0x3c] sm:$0x3]
    %v231 = vmul.f32 %v227, %v227
    %v232 = vmul.f32 %v228, %v228
    %v233 = vmul.f32 %v229, %v229
    %v234 = vmul.f32 %v230, %v230
    %v235 = vld [vmem:[#allocation2] sm:$0xff]
    %v240 = vcombine.low %v231, %v232
    %v241 = vcombine.low %v233, %v234
    %v243 = vunpack.c.l.s4 1983009808
    %v244 = vunpack.c.0.s8 %v243
    %v245 = vlaneseq
    %v246 = vshrl.u32 %v245, 7
    %v247 = vsub.s32 %v244, %v246
    %v248 = vrot.slane %v240, %v247
    %v250 = vunpack.c.l.s4 1983009808
    %v251 = vunpack.c.0.s8 %v250
    %v252 = vlaneseq
    %v253 = vshrl.u32 %v252, 7
    %v254 = vsub.s32 %v251, %v253
    %v255 = vrot.slane %v241, %v254
    %v256 = vcombine.low %v248, %v255
    %v258 = vadd.f32 %v235, %v256
    %259 = vst [vmem:[#allocation2] sm:$0xff] %v258
    %v260 = vld [vmem:[#allocation5 + $0xe] sm:$0x3]
    %v261 = vld [vmem:[#allocation5 + $0x1e] sm:$0x3]
    %v262 = vld [vmem:[#allocation5 + $0x2e] sm:$0x3]
    %v263 = vld [vmem:[#allocation5 + $0x3e] sm:$0x3]
    %v264 = vmul.f32 %v260, %v260
    %v265 = vmul.f32 %v261, %v261
    %v266 = vmul.f32 %v262, %v262
    %v267 = vmul.f32 %v263, %v263
    %v268 = vld [vmem:[#allocation2] sm:$0xff]
    %v273 = vcombine.low %v264, %v265
    %v274 = vcombine.low %v266, %v267
    %v276 = vunpack.c.l.s4 1983009808
    %v277 = vunpack.c.0.s8 %v276
    %v278 = vlaneseq
    %v279 = vshrl.u32 %v278, 7
    %v280 = vsub.s32 %v277, %v279
    %v281 = vrot.slane %v273, %v280
    %v283 = vunpack.c.l.s4 1983009808
    %v284 = vunpack.c.0.s8 %v283
    %v285 = vlaneseq
    %v286 = vshrl.u32 %v285, 7
    %v287 = vsub.s32 %v284, %v286
    %v288 = vrot.slane %v274, %v287
    %v289 = vcombine.low %v281, %v288
    %v291 = vadd.f32 %v268, %v289
    %292 = vst [vmem:[#allocation2] sm:$0xff] %v291
    // Predicated region
    $region14: #{tpu_custom_call.1} parent=1 // pred_check
      %p293 = pneg %p24
    $region15: #{tpu_custom_call.1} parent=1 // pred_check_branch
      %295 = sbr.rel (%p293) target = $region17
    $region16: #{tpu_custom_call.1} parent=1 // pred_region
      %v296 = vld [vmem:[#allocation2] sm:$0xff]
      %297 = vadd.xlane.f32.xlu0 %v296
      %v298 = vpop.xlane.xlu0 %297
      %v299 = vmul.f32 %v298, 0.5
      %s300 = sld [smem:[#allocation4]]
      %v301 = vstv %s300
      %v302 = vadd.f32 %v299, %v301
      %vm303 = vcmask 7168
      %304 = vst.msk [vmem:[%s2] sm:$0xff] %vm303, %v302
    $region17: #{tpu_custom_call.1} parent=1 // pred_fallthru
      _
    // Predicated region
    $region18: #{tpu_custom_call.1} parent=1 // pred_check
      _
    $region19: #{tpu_custom_call.1} parent=1 // pred_check_branch
      %306 = sbr.rel (0) target = $region21
    $region20: #{tpu_custom_call.1} parent=1 // pred_region
      _
    $region21: #{tpu_custom_call.1} parent=1 // pred_fallthru
      _
    // Predicated region
    $region22: #{tpu_custom_call.1} parent=1 // pred_check
      _
    $region23: #{tpu_custom_call.1} parent=1 // pred_check_branch
      %308 = sbr.rel (0) target = $region25
    $region24: #{tpu_custom_call.1} parent=1 // pred_region
      _
    $region25: #{tpu_custom_call.1} parent=1 // pred_fallthru
      _
    %309 = vsyncpa [#allocation6], 1

</llo_original>
